<compile_context>
chip_gen: v7x
topology: tpu7x:2x2x1
jax: 0.10.0
libtpu: 0.0.40
codegen_flags: <defaults>
</compile_context>

<pallas_src>
import jax
import jax.numpy as jnp
from jax.experimental import pallas as pl
from jax.experimental.pallas import tpu as pltpu


def _keyvalue_kernel(p_ref, w_ref, b_ref, k_ref, v_ref):
    # p_ref: (1, 9*Cin, H*W)   im2col patches (channels-major) for one batch element
    # w_ref: (Ck+Cv, 9*Cin)    fused Key/Value conv weights
    # b_ref: (Ck+Cv, 1)        fused bias (column vector, broadcasts along lanes)
    # k_ref: (1, Ck, H*W)      key output   (lane-dense: H*W on the lane axis)
    # v_ref: (1, Cv, H*W)      value output (lane-dense)
    ck = k_ref.shape[1]
    # Single fused matmul on the MXU; f32 accumulation.
    acc = jnp.dot(w_ref[...], p_ref[0], preferred_element_type=jnp.float32)
    acc = acc + b_ref[...]                       # bias broadcast over H*W lanes
    k_ref[...] = acc[:ck][None].astype(k_ref.dtype)
    v_ref[...] = acc[ck:][None].astype(v_ref.dtype)


def keyvalue_forward(x_nchw, wk, bk, wv, bv):
    """Pallas implementation of KeyValue.forward.

    Args:
      x_nchw: (N, Cin, H, W) float32 input (PyTorch NCHW convention).
      wk: (Ck, Cin, 3, 3) key conv weight (PyTorch OIHW layout).
      bk: (Ck,) key conv bias.
      wv: (Cv, Cin, 3, 3) value conv weight.
      bv: (Cv,) value conv bias.
    Returns:
      (key, value) in NCHW: (N, Ck, H, W), (N, Cv, H, W).
    """
    N, Cin, H, W = x_nchw.shape
    Ck = wk.shape[0]
    Cv = wv.shape[0]
    Cout = Ck + Cv
    HW = H * W
    K = 9 * Cin

    # --- wrapper glue (XLA): zero-pad + channels-major im2col -----------------
    # patches[n, (dy*3 + dx)*Cin + c, y*W + x] = x_pad[n, c, y+dy, x+dx]
    x_pad = jnp.pad(x_nchw, ((0, 0), (0, 0), (1, 1), (1, 1)))
    taps = []
    for dy in range(3):
        for dx in range(3):
            taps.append(x_pad[:, :, dy:dy + H, dx:dx + W].reshape(N, Cin, HW))
    patches = jnp.concatenate(taps, axis=1)                 # (N, 9*Cin, H*W)

    # Fused K/V weights with matching row layout: dy*3*Cin + dx*Cin + c.
    w_full = jnp.concatenate([wk, wv], axis=0)              # (Cout, Cin, 3, 3)
    w_fused = jnp.transpose(w_full, (0, 2, 3, 1)).reshape(Cout, K)
    b_fused = jnp.concatenate([bk, bv]).reshape(Cout, 1)

    key_flat, val_flat = pl.pallas_call(
        _keyvalue_kernel,
        out_shape=(
            jax.ShapeDtypeStruct((N, Ck, HW), x_nchw.dtype),
            jax.ShapeDtypeStruct((N, Cv, HW), x_nchw.dtype),
        ),
        grid_spec=pltpu.PrefetchScalarGridSpec(
            num_scalar_prefetch=0,
            grid=(N,),
            in_specs=[
                pl.BlockSpec((1, K, HW), lambda n: (n, 0, 0)),
                pl.BlockSpec((Cout, K), lambda n: (0, 0)),
                pl.BlockSpec((Cout, 1), lambda n: (0, 0)),
            ],
            out_specs=[
                pl.BlockSpec((1, Ck, HW), lambda n: (n, 0, 0)),
                pl.BlockSpec((1, Cv, HW), lambda n: (n, 0, 0)),
            ],
        ),
        compiler_params=pltpu.CompilerParams(
            dimension_semantics=("parallel",),
        ),
    )(patches, w_fused, b_fused)

    # Free reshapes: outputs are already NCHW-contiguous (N, C, H*W).
    key_nchw = key_flat.reshape(N, Ck, H, W)
    val_nchw = val_flat.reshape(N, Cv, H, W)
    return key_nchw, val_nchw


def _reference_conv_nchw(x, w, b):
    # Pure-JAX reference: same-padding 3x3 conv, NCHW / OIHW.
    out = jax.lax.conv_general_dilated(
        x, w, window_strides=(1, 1), padding=((1, 1), (1, 1)),
        dimension_numbers=("NCHW", "OIHW", "NCHW"))
    return out + b[None, :, None, None]


if __name__ == "__main__":
    # Module config (small, consistent with KeyValue(indim, keydim, valdim)).
    N, Cin, H, W = 2, 4, 16, 16
    keydim, valdim = 8, 16

    key = jax.random.PRNGKey(0)
    kx, kwk, kbk, kwv, kbv = jax.random.split(key, 5)

    # Deterministic parameter init (uniform, roughly matching Conv2d's fan-in scale).
    fan_in = Cin * 3 * 3
    bound = 1.0 / (fan_in ** 0.5)
    x = jax.random.normal(kx, (N, Cin, H, W), dtype=jnp.float32)
    wk = jax.random.uniform(kwk, (keydim, Cin, 3, 3), jnp.float32, -bound, bound)
    bk = jax.random.uniform(kbk, (keydim,), jnp.float32, -bound, bound)
    wv = jax.random.uniform(kwv, (valdim, Cin, 3, 3), jnp.float32, -bound, bound)
    bv = jax.random.uniform(kbv, (valdim,), jnp.float32, -bound, bound)

    fwd = jax.jit(keyvalue_forward)
    k_out, v_out = fwd(x, wk, bk, wv, bv)
    jax.block_until_ready((k_out, v_out))

    # Correctness check against XLA convolution.
    k_ref = _reference_conv_nchw(x, wk, bk)
    v_ref = _reference_conv_nchw(x, wv, bv)
    assert k_out.shape == (N, keydim, H, W)
    assert v_out.shape == (N, valdim, H, W)
    assert jnp.allclose(k_out, k_ref, atol=1e-4, rtol=1e-4)
    assert jnp.allclose(v_out, v_ref, atol=1e-4, rtol=1e-4)

    print("KERNEL_OK")
</pallas_src>

<mosaic_0001>
module attributes {stable_mosaic.version = 11 : i64} {
  func.func @_keyvalue_kernel(%arg0: i32, %arg1: memref<1x36x256xf32, #tpu.memory_space<vmem>>, %arg2: memref<24x36xf32, #tpu.memory_space<vmem>>, %arg3: memref<24x1xf32, #tpu.memory_space<vmem>>, %arg4: memref<1x8x256xf32, #tpu.memory_space<vmem>>, %arg5: memref<1x16x256xf32, #tpu.memory_space<vmem>>) attributes {dimension_semantics = [#tpu.dimension_semantics<parallel>], iteration_bounds = array<i64: 2>, scalar_prefetch = 0 : i64, scratch_operands = 0 : i64, tpu.core_type = #tpu.core_type<tc>, window_params = [{transform_indices = @transform_0, window_bounds = array<i64: 1, 36, 256>}, {pipeline_mode = #tpu.pipeline_mode<synchronous>, transform_indices = @transform_1, window_bounds = array<i64: 24, 36>}, {pipeline_mode = #tpu.pipeline_mode<synchronous>, transform_indices = @transform_2, window_bounds = array<i64: 24, 1>}, {transform_indices = @transform_3, window_bounds = array<i64: 1, 8, 256>}, {transform_indices = @transform_4, window_bounds = array<i64: 1, 16, 256>}]} {
    %c0 = arith.constant 0 : index
    %c0_0 = arith.constant 0 : index
    %0 = vector.load %arg2[%c0, %c0_0] : memref<24x36xf32, #tpu.memory_space<vmem>>, vector<24x36xf32>
    %c0_1 = arith.constant 0 : index
    %c0_2 = arith.constant 0 : index
    %c0_3 = arith.constant 0 : index
    %1 = vector.load %arg1[%c0_1, %c0_2, %c0_3] : memref<1x36x256xf32, #tpu.memory_space<vmem>>, vector<1x36x256xf32>
    %2 = vector.shape_cast %1 : vector<1x36x256xf32> to vector<36x256xf32>
    %cst = arith.constant dense<0.000000e+00> : vector<24x256xf32>
    %3 = tpu.matmul %0, %2, %cst {dimension_numbers = #tpu.dot_dimension_numbers<[1], [0], [0], [1], [0, 0, 1, 1], [], []>} : vector<24x36xf32>, vector<36x256xf32>, vector<24x256xf32> -> vector<24x256xf32>
    %c0_4 = arith.constant 0 : index
    %c0_5 = arith.constant 0 : index
    %4 = vector.load %arg3[%c0_4, %c0_5] : memref<24x1xf32, #tpu.memory_space<vmem>>, vector<24x1xf32>
    %5 = vector.broadcast %4 : vector<24x1xf32> to vector<24x256xf32>
    %6 = arith.addf %3, %5 : vector<24x256xf32>
    %7 = vector.extract_strided_slice %6 {offsets = [0, 0], sizes = [8, 256], strides = [1, 1]} : vector<24x256xf32> to vector<8x256xf32>
    %8 = vector.shape_cast %7 : vector<8x256xf32> to vector<1x8x256xf32>
    %c0_6 = arith.constant 0 : index
    %c0_7 = arith.constant 0 : index
    %c0_8 = arith.constant 0 : index
    %9 = vector.load %arg4[%c0_6, %c0_7, %c0_8] : memref<1x8x256xf32, #tpu.memory_space<vmem>>, vector<1x8x256xf32>
    tpu.vector_store %arg4[%c0_6, %c0_7, %c0_8], %8 {strides = array<i32>} : memref<1x8x256xf32, #tpu.memory_space<vmem>>, vector<1x8x256xf32>,
    %10 = vector.extract_strided_slice %6 {offsets = [8, 0], sizes = [16, 256], strides = [1, 1]} : vector<24x256xf32> to vector<16x256xf32>
    %11 = vector.shape_cast %10 : vector<16x256xf32> to vector<1x16x256xf32>
    %c0_9 = arith.constant 0 : index
    %c0_10 = arith.constant 0 : index
    %c0_11 = arith.constant 0 : index
    %12 = vector.load %arg5[%c0_9, %c0_10, %c0_11] : memref<1x16x256xf32, #tpu.memory_space<vmem>>, vector<1x16x256xf32>
    tpu.vector_store %arg5[%c0_9, %c0_10, %c0_11], %11 {strides = array<i32>} : memref<1x16x256xf32, #tpu.memory_space<vmem>>, vector<1x16x256xf32>,
    return
  }
  func.func @transform_0(%arg0: i32) -> (i32, i32, i32) {
    %c0_i32 = arith.constant 0 : i32
    %c0_i32_0 = arith.constant 0 : i32
    %c0_i32_1 = arith.constant 0 : i32
    return %arg0, %c0_i32, %c0_i32_0 : i32, i32, i32
  }
  func.func @transform_1(%arg0: i32) -> (i32, i32) {
    %c0_i32 = arith.constant 0 : i32
    %c0_i32_0 = arith.constant 0 : i32
    %c0_i32_1 = arith.constant 0 : i32
    return %c0_i32, %c0_i32_0 : i32, i32
  }
  func.func @transform_2(%arg0: i32) -> (i32, i32) {
    %c0_i32 = arith.constant 0 : i32
    %c0_i32_0 = arith.constant 0 : i32
    %c0_i32_1 = arith.constant 0 : i32
    return %c0_i32, %c0_i32_0 : i32, i32
  }
  func.func @transform_3(%arg0: i32) -> (i32, i32, i32) {
    %c0_i32 = arith.constant 0 : i32
    %c0_i32_0 = arith.constant 0 : i32
    %c0_i32_1 = arith.constant 0 : i32
    return %arg0, %c0_i32, %c0_i32_0 : i32, i32, i32
  }
  func.func @transform_4(%arg0: i32) -> (i32, i32, i32) {
    %c0_i32 = arith.constant 0 : i32
    %c0_i32_0 = arith.constant 0 : i32
    %c0_i32_1 = arith.constant 0 : i32
    return %arg0, %c0_i32, %c0_i32_0 : i32, i32, i32
  }
}

</mosaic_0001>

<llo_original>
// kernel: keyvalue_forward.1
$region0: #{keyvalue_forward.1}
  #allocation0 [shape = 'u32[]', space=smem, size = 0x4, offset = 0x4, fixed_abs, tag = 'smem constant byte address 0x4 - core index']
  #allocation1 [shape = 'u32[144,128]{1,0:T(1,128)}', space=vmem, size = 0x12000, scoped, tag = 'internal scratch']
  %s0 = inlined_call_operand.vmem [shape: f32[2,36,256], index: 0, kind: input, shape index: {}]
  %s1 = inlined_call_operand.vmem [shape: f32[24,36], index: 1, kind: input, shape index: {}]
  %s2 = inlined_call_operand.vmem [shape: f32[24,1], index: 2, kind: input, shape index: {}]
  %s3 = inlined_call_operand.vmem [shape: f32[2,8,256], index: 3, kind: output, shape index: {0}]
  %s4 = inlined_call_operand.vmem [shape: f32[2,16,256], index: 4, kind: output, shape index: {1}]
  %5 = xla_tuple %s3, %s4
  %s6 = sld [smem:[#allocation0]]
  $region53: #{keyvalue_forward.1} parent=0
    _
  %s8 = ssub.s32 1, %s6
  %s9 = scalar_select 0, %s8, %s6
  loop: start=0, step=1, limit=4
  $region2: #{keyvalue_forward.1} parent=0 // loop_pre_header
    _
  $region3: #{keyvalue_forward.1} parent=0 // loop_header
    %s11 = sphi 0, %s15
    %p12 = scmp.ge.s32.totalorder %s11, 4
    %s21 = sphi 0, %s23
    %s24 = sphi 0, %s21
    %s25 = sphi 0, %s24
    %s41 = sphi 0, %s25
    %s45 = sphi 0, %s45
    %s47 = sphi 0, %s45
    %s48 = sphi 0, %s47
    %s62 = sphi 0, %s48
    %s66 = sphi 0, %s66
    %s68 = sphi 0, %s66
    %s69 = sphi 0, %s68
    %s83 = sphi 0, %s69
    %s89 = sphi 0, %s91
    %s92 = sphi 0, %s89
    %s93 = sphi 0, %s92
    %s109 = sphi 0, %s93
    %s115 = sphi 0, %s117
    %s118 = sphi 0, %s115
    %s119 = sphi 0, %s118
    %s135 = sphi 0, %s119
  $region4: #{keyvalue_forward.1} parent=0 // loop_header_branch
    %14 = sbr.rel (%p12) target = $region8
  $region5: #{keyvalue_forward.1} parent=0 // loop_body
    %s16 = ssub.s32 %s11, 1
    %s17 = ssub.s32 %s11, 2
    %s18 = sadd.s32 %s11, 1
    %s19 = ssub.s32 %s11, %s18
    %p20 = scmp.eq.s32.totalorder %s19, 0
    %s22 = sadd.s32 %s21, 1
    %s23 = scalar_select %p20, %s21, %s22
    %p26 = pneg %p20
    %p27 = scmp.eq.s32.totalorder %s11, 1
    %p28 = por %p26, %p27
    %p29 = scmp.ne.s32.totalorder %s21, %s24
    %p30 = scmp.eq.s32.totalorder %s11, 0
    %p31 = por %p29, %p30
    %p32 = scmp.ne.s32.totalorder %s21, %s24
    %p33 = scmp.eq.s32.totalorder %s16, 1
    %p34 = por %p32, %p33
    %p35 = scmp.ne.s32.totalorder %s24, %s25
    %p36 = scmp.eq.s32.totalorder %s16, 0
    %p37 = por %p35, %p36
    %p38 = scmp.ne.s32.totalorder %s24, %s25
    %p39 = scmp.eq.s32.totalorder %s17, 1
    %p40 = por %p38, %p39
    %p42 = scmp.ne.s32.totalorder %s25, %s41
    %p43 = scmp.eq.s32.totalorder %s17, 0
    %p44 = por %p42, %p43
    %s46 = sadd.s32 %s45, 1
    %p49 = scmp.eq.s32.totalorder %s11, 1
    %p50 = scmp.ne.s32.totalorder %s45, %s47
    %p51 = scmp.eq.s32.totalorder %s11, 0
    %p52 = por %p50, %p51
    %p53 = scmp.ne.s32.totalorder %s45, %s47
    %p54 = scmp.eq.s32.totalorder %s16, 1
    %p55 = por %p53, %p54
    %p56 = scmp.ne.s32.totalorder %s47, %s48
    %p57 = scmp.eq.s32.totalorder %s16, 0
    %p58 = por %p56, %p57
    %p59 = scmp.ne.s32.totalorder %s47, %s48
    %p60 = scmp.eq.s32.totalorder %s17, 1
    %p61 = por %p59, %p60
    %p63 = scmp.ne.s32.totalorder %s48, %s62
    %p64 = scmp.eq.s32.totalorder %s17, 0
    %p65 = por %p63, %p64
    %s67 = sadd.s32 %s66, 1
    %p70 = scmp.eq.s32.totalorder %s11, 1
    %p71 = scmp.ne.s32.totalorder %s66, %s68
    %p72 = scmp.eq.s32.totalorder %s11, 0
    %p73 = por %p71, %p72
    %p74 = scmp.ne.s32.totalorder %s66, %s68
    %p75 = scmp.eq.s32.totalorder %s16, 1
    %p76 = por %p74, %p75
    %p77 = scmp.ne.s32.totalorder %s68, %s69
    %p78 = scmp.eq.s32.totalorder %s16, 0
    %p79 = por %p77, %p78
    %p80 = scmp.ne.s32.totalorder %s68, %s69
    %p81 = scmp.eq.s32.totalorder %s17, 1
    %p82 = por %p80, %p81
    %p84 = scmp.ne.s32.totalorder %s69, %s83
    %p85 = scmp.eq.s32.totalorder %s17, 0
    %p86 = por %p84, %p85
    %s87 = ssub.s32 %s11, %s18
    %p88 = scmp.eq.s32.totalorder %s87, 0
    %s90 = sadd.s32 %s89, 1
    %s91 = scalar_select %p88, %s89, %s90
    %p94 = pneg %p88
    %p95 = scmp.eq.s32.totalorder %s11, 1
    %p96 = por %p94, %p95
    %p97 = scmp.ne.s32.totalorder %s89, %s92
    %p98 = scmp.eq.s32.totalorder %s11, 0
    %p99 = por %p97, %p98
    %p100 = scmp.ne.s32.totalorder %s89, %s92
    %p101 = scmp.eq.s32.totalorder %s16, 1
    %p102 = por %p100, %p101
    %p103 = scmp.ne.s32.totalorder %s92, %s93
    %p104 = scmp.eq.s32.totalorder %s16, 0
    %p105 = por %p103, %p104
    %p106 = scmp.ne.s32.totalorder %s92, %s93
    %p107 = scmp.eq.s32.totalorder %s17, 1
    %p108 = por %p106, %p107
    %p110 = scmp.ne.s32.totalorder %s93, %s109
    %p111 = scmp.eq.s32.totalorder %s17, 0
    %p112 = por %p110, %p111
    %s113 = ssub.s32 %s11, %s18
    %p114 = scmp.eq.s32.totalorder %s113, 0
    %s116 = sadd.s32 %s115, 1
    %s117 = scalar_select %p114, %s115, %s116
    %p120 = pneg %p114
    %p121 = scmp.eq.s32.totalorder %s11, 1
    %p122 = por %p120, %p121
    %p123 = scmp.ne.s32.totalorder %s115, %s118
    %p124 = scmp.eq.s32.totalorder %s11, 0
    %p125 = por %p123, %p124
    %p126 = scmp.ne.s32.totalorder %s115, %s118
    %p127 = scmp.eq.s32.totalorder %s16, 1
    %p128 = por %p126, %p127
    %p129 = scmp.ne.s32.totalorder %s118, %s119
    %p130 = scmp.eq.s32.totalorder %s16, 0
    %p131 = por %p129, %p130
    %p132 = scmp.ne.s32.totalorder %s118, %s119
    %p133 = scmp.eq.s32.totalorder %s17, 1
    %p134 = por %p132, %p133
    %p136 = scmp.ne.s32.totalorder %s119, %s135
    %p137 = scmp.eq.s32.totalorder %s17, 0
    %p138 = por %p136, %p137
    %p139 = scmp.le.s32.totalorder 1, %s11
    %p140 = scmp.lt.s32.totalorder %s11, 3
    %p141 = pnand %p139, %p140
    %p142 = pneg %p141
    // Predicated region
    $region9: #{keyvalue_forward.1} parent=5 // pred_check
      _
    $region10: #{keyvalue_forward.1} parent=5 // pred_check_branch
      %144 = sbr.rel (%p141) target = $region12
    $region11: #{keyvalue_forward.1} parent=5 // pred_region
      %s145 = ssub.s32 %s11, 1
      // Predicated region
      $region13: #{keyvalue_forward.1} parent=11 // pred_check
        %p146 = pneg %p58
      $region14: #{keyvalue_forward.1} parent=11 // pred_check_branch
        %148 = sbr.rel (%p146) target = $region16
      $region15: #{keyvalue_forward.1} parent=11 // pred_region
        _
      $region16: #{keyvalue_forward.1} parent=11 // pred_fallthru
        _
      // Predicated region
      $region17: #{keyvalue_forward.1} parent=11 // pred_check
        %p149 = pneg %p79
      $region18: #{keyvalue_forward.1} parent=11 // pred_check_branch
        %151 = sbr.rel (%p149) target = $region20
      $region19: #{keyvalue_forward.1} parent=11 // pred_region
        _
      $region20: #{keyvalue_forward.1} parent=11 // pred_fallthru
        _
    $region12: #{keyvalue_forward.1} parent=5 // pred_fallthru
      _
    %p152 = scmp.lt.s32.totalorder %s11, 2
    // Predicated region
    $region21: #{keyvalue_forward.1} parent=5 // pred_check
      %p153 = pneg %p152
    $region22: #{keyvalue_forward.1} parent=5 // pred_check_branch
      %155 = sbr.rel (%p153) target = $region24
    $region23: #{keyvalue_forward.1} parent=5 // pred_region
      // Predicated region
      $region25: #{keyvalue_forward.1} parent=23 // pred_check
        %p156 = pneg %p31
      $region26: #{keyvalue_forward.1} parent=23 // pred_check_branch
        %158 = sbr.rel (%p156) target = $region28
      $region27: #{keyvalue_forward.1} parent=23 // pred_region
        %p159 = scmp.lt.s32.totalorder %s11, 1
        %s160 = scalar_select %p159, %s11, 1
        %s161 = smul.addr %s160, 10
        %s162 = smul.addr %s161, 8
        %s163 = scalar_lea.vmem %s0, %s162
      $region28: #{keyvalue_forward.1} parent=23 // pred_fallthru
        _
    $region24: #{keyvalue_forward.1} parent=5 // pred_fallthru
      _
    %p164 = scmp.le.s32.totalorder 1, %s11
    %p165 = scmp.lt.s32.totalorder %s11, 3
    %p166 = pnand %p164, %p165
    %p167 = pneg %p166
    // Predicated region
    $region29: #{keyvalue_forward.1} parent=5 // pred_check
      _
    $region30: #{keyvalue_forward.1} parent=5 // pred_check_branch
      %169 = sbr.rel (%p166) target = $region32
    $region31: #{keyvalue_forward.1} parent=5 // pred_region
      %s170 = ssub.s32 %s11, 1
      %p171 = scmp.lt.s32.totalorder %s16, 1
      %s172 = scalar_select %p171, %s16, 1
      %s173 = smul.addr %s172, 10
      %s174 = smul.addr %s173, 8
      %s175 = scalar_lea.vmem %s0, %s174
      %p176 = pneg %p37
      %p177 = pneg %p34
      %p178 = pneg %p58
      %p179 = pneg %p55
      %p180 = pneg %p79
      %p181 = pneg %p76
      %p182 = pneg %p105
      %p183 = pneg %p102
      %p184 = scmp.lt.s32.totalorder %s16, 1
      %s185 = scalar_select %p184, %s16, 1
      %s186 = smul.addr %s185, 2
      %s187 = smul.addr %s186, 8
      %s188 = scalar_lea.vmem %s3, %s187
      %p189 = pneg %p131
      %p190 = pneg %p128
      %p191 = scmp.lt.s32.totalorder %s16, 1
      %s192 = scalar_select %p191, %s16, 1
      %s193 = smul.addr %s192, 4
      %s194 = smul.addr %s193, 8
      %s195 = scalar_lea.vmem %s4, %s194
      %p196 = scmp.lt.s32.totalorder %s16, 1
      %s197 = scalar_select %p196, %s16, 1
      %s198 = smul.addr %s197, 10
      %s199 = smul.addr %s198, 8
      %s200 = scalar_lea.vmem %s0, %s199
      %p201 = scmp.lt.s32.totalorder %s16, 1
      %s202 = scalar_select %p201, %s16, 1
      %s203 = smul.addr %s202, 2
      %s204 = smul.addr %s203, 8
      %s205 = scalar_lea.vmem %s3, %s204
      %p206 = scmp.lt.s32.totalorder %s16, 1
      %s207 = scalar_select %p206, %s16, 1
      %s208 = smul.addr %s207, 4
      %s209 = smul.addr %s208, 8
      %s210 = scalar_lea.vmem %s4, %s209
      %v211 = vld [vmem:[%s1] sm:$0xff]
      %v212 = vld [vmem:[%s1 + $0x8] sm:$0xff]
      %v213 = vld [vmem:[%s1 + $0x10] sm:$0xff]
      %v214 = vld [vmem:[%s200] sm:$0xff]
      %v215 = vld [vmem:[%s200 + $0x8] sm:$0xff]
      %v216 = vld [vmem:[%s200 + $0x10] sm:$0xff]
      %v217 = vld [vmem:[%s200 + $0x18] sm:$0xff]
      %v218 = vld [vmem:[%s200 + $0x20] sm:$0xff]
      %v219 = vld [vmem:[%s200 + $0x28] sm:$0xff]
      %v220 = vld [vmem:[%s200 + $0x30] sm:$0xff]
      %v221 = vld [vmem:[%s200 + $0x38] sm:$0xff]
      %v222 = vld [vmem:[%s200 + $0x40] sm:$0xf]
      %v223 = vld [vmem:[%s200 + $0x48] sm:$0xf]
      %v224 = vld [vmem:[%s2] sm:$0xff]
      %v225 = vld [vmem:[%s2 + $0x8] sm:$0xff]
      %v226 = vld [vmem:[%s2 + $0x10] sm:$0xff]
      %228 = vset.pattern.permute.xlu0 0
      %229 = vperm.xlu0 %228, %v224
      %v230 = vpop.permute.xlu0 %229
      %233 = vset.pattern.permute.xlu0 0
      %234 = vperm.xlu0 %233, %v225
      %v235 = vpop.permute.xlu0 %234
      %238 = vset.pattern.permute.xlu0 0
      %239 = vperm.xlu0 %238, %v226
      %v240 = vpop.permute.xlu0 %239
      %vm242 = vcmask 293888
      %v244 = vsel %vm242, %v211, 0
      %v247 = vsel %vm242, %v212, 0
      %v250 = vsel %vm242, %v213, 0
      %vm252 = vcmask 1043456
      %v254 = vsel %vm252, %v222, 0
      %v257 = vsel %vm252, %v223, 0
      %259 = vmatprep.subr.mxu0 %v215
      %260 = vmatpush1.msra.mxu0 %v214
      %261 = vmatprep.subr.mxu0 %v217
      %262 = vmatpush1.msra.mxu0 %v216
      %263 = vmatprep.subr.mxu0 %v219
      %264 = vmatpush1.msra.mxu0 %v218
      %265 = vmatprep.subr.mxu0 %v221
      %266 = vmatpush1.msra.mxu0 %v220
      %267 = vmatprep.subr.mxu0 %v257
      %268 = vmatpush1.msra.mxu0 %v254
      %269 = vmatprep.subr.mxu0 0.0
      %270 = vmatpush1.msra.mxu0 0.0
      %271 = vmatprep.subr.mxu0 0.0
      %272 = vmatpush1.msra.mxu0 0.0
      %273 = vmatprep.subr.mxu0 0.0
      %274 = vmatpush1.msra.mxu0 0.0
      %275 = vmatprep.subr.mxu0 0.0
      %276 = vmatpush1.msra.mxu0 0.0
      %277 = vmatprep.subr.mxu0 0.0
      %278 = vmatpush1.msra.mxu0 0.0
      %279 = vmatprep.subr.mxu0 0.0
      %280 = vmatpush1.msra.mxu0 0.0
      %281 = vmatprep.subr.mxu0 0.0
      %282 = vmatpush1.msra.mxu0 0.0
      %283 = vmatprep.subr.mxu0 0.0
      %284 = vmatpush1.msra.mxu0 0.0
      %285 = vmatprep.subr.mxu0 0.0
      %286 = vmatpush1.msra.mxu0 0.0
      %287 = vmatprep.subr.mxu0 0.0
      %288 = vmatpush1.msra.mxu0 0.0
      %289 = vmatprep.subr.mxu0 0.0
      %290 = vmatpush1.msra.mxu0 0.0
      %291 = vmatprep.subr.mxu0 0.0
      %292 = vmatpush1.msra.mxu0 0.0
      %293 = vmatprep.subr.mxu0 0.0
      %294 = vmatpush1.msra.mxu0 0.0
      %295 = vmatprep.subr.mxu0 0.0
      %296 = vmatpush1.msra.mxu0 0.0
      %297 = vmatprep.subr.mxu0 0.0
      %298 = vmatpush1.msra.mxu0 0.0
      %299 = vmatprep.subr.mxu0 0.0
      %300 = vmatpush1.msra.mxu0 0.0
      %301 = vmatprep.subr.mxu0 0.0
      %302 = vmatpush1.msra.mxu0 0.0
      %303 = vmatprep.subr.mxu0 0.0
      %304 = vmatpush1.msra.mxu0 0.0
      %305 = vmatprep.subr.mxu0 0.0
      %306 = vmatpush1.msra.mxu0 0.0
      %307 = vmatprep.subr.mxu0 0.0
      %308 = vmatpush1.msra.mxu0 0.0
      %309 = vmatprep.subr.mxu0 0.0
      %310 = vmatpush1.msra.mxu0 0.0
      %311 = vmatprep.subr.mxu0 0.0
      %312 = vmatpush1.msra.mxu0 0.0
      %313 = vmatprep.subr.mxu0 0.0
      %314 = vmatpush1.msra.mxu0 0.0
      %315 = vmatprep.subr.mxu0 0.0
      %316 = vmatpush1.msra.mxu0 0.0
      %317 = vmatprep.subr.mxu0 0.0
      %318 = vmatpush1.msra.mxu0 0.0
      %319 = vmatprep.subr.mxu0 0.0
      %320 = vmatpush1.msra.mxu0 0.0
      %321 = vmatprep.subr.mxu0 0.0
      %322 = vmatpush1.msra.mxu0 0.0
      %323 = vmatprep.mubr.f32.mxu0 0.0
      %324 = vmatmul.mubr.f32.gmra.mrb[0].mxu0 %v244
      %v325 = vpop.f32.mrb[0].mxu0
      %v326 = vadd.f32 %v230, %v325
      %v327 = vpop.f32.mrb[0].mxu0
      %v328 = vadd.f32 %v230, %v327
      %329 = vmatprep.mubr.f32.mxu0 0.0
      %330 = vmatmul.mubr.f32.gmra.mrb[0].mxu0 %v247
      %v331 = vpop.f32.mrb[0].mxu0
      %v332 = vadd.f32 %v235, %v331
      %v333 = vpop.f32.mrb[0].mxu0
      %v334 = vadd.f32 %v235, %v333
      %335 = vmatprep.mubr.f32.mxu0 0.0
      %336 = vmatmul.mubr.f32.gmra.mrb[0].mxu0 %v250
      %v337 = vpop.f32.mrb[0].mxu0
      %v338 = vadd.f32 %v240, %v337
      %v339 = vpop.f32.mrb[0].mxu0
      %v340 = vadd.f32 %v240, %v339
      %341 = vdwg.mxu0
      %342 = vst [vmem:[%s205] sm:$0xff] %v326
      %343 = vst [vmem:[%s205 + $0x8] sm:$0xff] %v328
      %344 = vst [vmem:[%s210] sm:$0xff] %v332
      %345 = vst [vmem:[%s210 + $0x8] sm:$0xff] %v334
      %346 = vst [vmem:[%s210 + $0x10] sm:$0xff] %v338
      %347 = vst [vmem:[%s210 + $0x18] sm:$0xff] %v340
      %p348 = scmp.lt.s32.totalorder %s16, 1
      %s349 = scalar_select %p348, %s16, 1
      %s350 = smul.addr %s349, 2
      %s351 = smul.addr %s350, 8
      %s352 = scalar_lea.vmem %s3, %s351
      %p353 = scmp.lt.s32.totalorder %s16, 1
      %s354 = scalar_select %p353, %s16, 1
      %s355 = smul.addr %s354, 4
      %s356 = smul.addr %s355, 8
      %s357 = scalar_lea.vmem %s4, %s356
      // Predicated region
      $region33: #{keyvalue_forward.1} parent=31 // pred_check
        %p358 = pneg %p102
      $region34: #{keyvalue_forward.1} parent=31 // pred_check_branch
        %360 = sbr.rel (%p358) target = $region36
      $region35: #{keyvalue_forward.1} parent=31 // pred_region
        _
      $region36: #{keyvalue_forward.1} parent=31 // pred_fallthru
        _
      // Predicated region
      $region37: #{keyvalue_forward.1} parent=31 // pred_check
        %p361 = pneg %p128
      $region38: #{keyvalue_forward.1} parent=31 // pred_check_branch
        %363 = sbr.rel (%p361) target = $region40
      $region39: #{keyvalue_forward.1} parent=31 // pred_region
        _
      $region40: #{keyvalue_forward.1} parent=31 // pred_fallthru
        _
    $region32: #{keyvalue_forward.1} parent=5 // pred_fallthru
      _
    %p364 = scmp.le.s32.totalorder 2, %s11
    // Predicated region
    $region41: #{keyvalue_forward.1} parent=5 // pred_check
      %p365 = pneg %p364
    $region42: #{keyvalue_forward.1} parent=5 // pred_check_branch
      %367 = sbr.rel (%p365) target = $region44
    $region43: #{keyvalue_forward.1} parent=5 // pred_region
      %s368 = ssub.s32 %s11, 2
      // Predicated region
      $region45: #{keyvalue_forward.1} parent=43 // pred_check
        %p369 = pneg %p108
      $region46: #{keyvalue_forward.1} parent=43 // pred_check_branch
        %371 = sbr.rel (%p369) target = $region48
      $region47: #{keyvalue_forward.1} parent=43 // pred_region
        %p372 = scmp.lt.s32.totalorder %s17, 1
        %s373 = scalar_select %p372, %s17, 1
        %s374 = smul.addr %s373, 2
        %s375 = smul.addr %s374, 8
        %s376 = scalar_lea.vmem %s3, %s375
      $region48: #{keyvalue_forward.1} parent=43 // pred_fallthru
        _
      // Predicated region
      $region49: #{keyvalue_forward.1} parent=43 // pred_check
        %p377 = pneg %p134
      $region50: #{keyvalue_forward.1} parent=43 // pred_check_branch
        %379 = sbr.rel (%p377) target = $region52
      $region51: #{keyvalue_forward.1} parent=43 // pred_region
        %p380 = scmp.lt.s32.totalorder %s17, 1
        %s381 = scalar_select %p380, %s17, 1
        %s382 = smul.addr %s381, 4
        %s383 = smul.addr %s382, 8
        %s384 = scalar_lea.vmem %s4, %s383
      $region52: #{keyvalue_forward.1} parent=43 // pred_fallthru
        _
    $region44: #{keyvalue_forward.1} parent=5 // pred_fallthru
      _
  $region6: #{keyvalue_forward.1} parent=0 // loop_footer
    %s15 = sadd.s32 1, %s11
  $region7: #{keyvalue_forward.1} parent=0 // loop_footer_branch
    %10 = sbr.rel target = $region3
  $region8: #{keyvalue_forward.1} parent=0 // loop_exit
    _

</llo_original>
